<compile_context>
chip_gen: v5e
topology: v5e:2x2
jax: 0.10.0
libtpu: 0.0.40
codegen_flags: <defaults>
</compile_context>

<pallas_src>
import functools
import math

import jax
import jax.numpy as jnp
from jax import lax
from jax.experimental import pallas as pl
from jax.experimental.pallas import tpu as pltpu


# ------------------------------ elementwise -----------------------------------


def _softplus(v):
    # matches torch.nn.Softplus (beta=1, threshold=20); the min() guard keeps the
    # untaken exp branch finite for large inputs / padded garbage columns.
    return jnp.where(v > 20.0, v, jnp.log1p(jnp.exp(jnp.minimum(v, 20.0))))


def _squish_softplus(v):
    # squishing_nonlin(softplus(v)) == softplus(v) ** 0.25
    return jnp.sqrt(jnp.sqrt(_softplus(v)))


# -------------------------------- kernel ---------------------------------------


def encoder_kernel(y_ref, x_ref, wy_ref, wx_ref, b_in_ref, w_out_ref, b_out_ref,
                   out_ref):
    """Feature-major compute: batch lives on the 128-lane axis.

    y_ref     : (tb, y_dim)      batch-major input tile (no wrapper transpose)
    x_ref     : (tb, x_dim)
    wy_ref    : (H, y_dim)       torch-layout fcy weight
    wx_ref    : (H, x_dim)       torch-layout fcx weight
    b_in_ref  : (2H, 1)          [by ; bx]
    w_out_ref : (2*z_dim, 2H)    row-stacked fc21 / fc22 weights
    b_out_ref : (2*z_dim, 1)     [b21 ; b22]
    out_ref   : (2*z_dim, tb)    rows [0:z) = z_loc, rows [z:2z) = z_scale
    """
    # fcy / fcx: contract both last dims (W @ X^T) -> feature-major (H, tb).
    hy = lax.dot_general(wy_ref[...], y_ref[...], (((1,), (1,)), ((), ())),
                         preferred_element_type=jnp.float32)
    hx = lax.dot_general(wx_ref[...], x_ref[...], (((1,), (1,)), ((), ())),
                         preferred_element_type=jnp.float32)
    # torch.cat((hiddeny, hiddenx), 1) in batch-major == sublane concat here.
    h = jnp.concatenate([hy, hx], axis=0) + b_in_ref[...]          # (2H, tb)

    # three rounds of squishing(softplus(.)) — the EUP-bound part.
    for _ in range(3):
        h = _squish_softplus(h)

    # fused fc21/fc22: one MXU push -> (2*z_dim, tb)
    pre = (jnp.dot(w_out_ref[...], h, preferred_element_type=jnp.float32)
           + b_out_ref[...])

    # Static row-slice split: z_loc rows stay linear, only z_scale rows get the
    # extra squish(softplus(.)) round.
    z = out_ref.shape[0] // 2
    out_ref[:z, :] = pre[:z, :]
    out_ref[z:, :] = _squish_softplus(pre[z:, :])


# -------------------------------- wrapper ---------------------------------------


def _round_up(n, m):
    return ((n + m - 1) // m) * m


def _pick_batch_tile(b_pad, batch_tile):
    """Largest lane-dense divisor of b_pad that is <= batch_tile; prefer >= 2
    grid steps (v7x megacore) once there is enough batch."""
    k = b_pad // 128
    divisors = [m for m in range(1, k + 1) if k % m == 0]
    cands = [m for m in divisors if 128 * m <= batch_tile] or [1]
    if b_pad >= 256:
        two_step = [m for m in cands if (k // m) >= 2]
        if two_step:
            cands = two_step
    return 128 * max(cands)


def prepack_params(params):
    """One-time packing of torch-layout params (hoisted out of the hot path)."""
    return {
        "wy": jnp.asarray(params["wy"], jnp.float32),               # (H, y_dim)
        "wx": jnp.asarray(params["wx"], jnp.float32),               # (H, x_dim)
        "b_in": jnp.concatenate([params["by"], params["bx"]])
                  .astype(jnp.float32)[:, None],                     # (2H, 1)
        "w_out": jnp.concatenate([params["w21"], params["w22"]], axis=0)
                   .astype(jnp.float32),                             # (2z, 2H)
        "b_out": jnp.concatenate([params["b21"], params["b22"]])
                   .astype(jnp.float32)[:, None],                    # (2z, 1)
    }


@functools.partial(jax.jit, static_argnames=("batch_tile",))
def encoder_forward(y, x, packed, *, batch_tile=1024):
    """y: (B, y_dim), x: (B, x_dim) float32. Returns (z_loc, z_scale), (B, z_dim) each."""
    B, y_dim = y.shape
    Bx, x_dim = x.shape
    assert Bx == B

    wy, wx = packed["wy"], packed["wx"]
    b_in, w_out, b_out = packed["b_in"], packed["w_out"], packed["b_out"]
    H = wy.shape[0]
    z_dim = w_out.shape[0] // 2

    # Pad batch only to a lane multiple; tile is a divisor of B_pad (no waste).
    B_pad = _round_up(B, 128)
    tb = _pick_batch_tile(B_pad, batch_tile)
    if B_pad != B:
        y = jnp.pad(y, ((0, B_pad - B), (0, 0)))
        x = jnp.pad(x, ((0, B_pad - B), (0, 0)))

    grid = (B_pad // tb,)

    def const(shape):
        # packed weights/biases: same (full) block every grid step
        return pl.BlockSpec(shape, lambda i: (0, 0))

    # Advisory cost: this kernel is transcendental-dominated.
    cost = pl.CostEstimate(
        flops=2 * B_pad * (H * y_dim + H * x_dim + 2 * z_dim * 2 * H),
        transcendentals=13 * 2 * H * B_pad,
        bytes_accessed=4 * (B_pad * (y_dim + x_dim + 2 * z_dim)
                            + H * (y_dim + x_dim) + 2 * H
                            + 2 * z_dim * 2 * H + 2 * z_dim),
    )

    out_t = pl.pallas_call(
        encoder_kernel,
        out_shape=jax.ShapeDtypeStruct((2 * z_dim, B_pad), jnp.float32),
        grid_spec=pltpu.PrefetchScalarGridSpec(
            num_scalar_prefetch=0,
            grid=grid,
            in_specs=[
                pl.BlockSpec((tb, y_dim), lambda i: (i, 0)),   # y batch tile
                pl.BlockSpec((tb, x_dim), lambda i: (i, 0)),   # x batch tile
                const((H, y_dim)),                             # wy
                const((H, x_dim)),                             # wx
                const((2 * H, 1)),                             # b_in
                const((2 * z_dim, 2 * H)),                     # w_out
                const((2 * z_dim, 1)),                         # b_out
            ],
            out_specs=pl.BlockSpec((2 * z_dim, tb), lambda i: (0, i)),
        ),
        compiler_params=pltpu.CompilerParams(
            dimension_semantics=("parallel",),
        ),
        cost_estimate=cost,
    )(y, x, wy, wx, b_in, w_out, b_out)

    # Downstream wants torch-style (B, z_dim); if a feature-major (z_dim, B)
    # consumer exists these two tiny transposes can be dropped entirely.
    z_loc = out_t[:z_dim, :B].T
    z_scale = out_t[z_dim:, :B].T
    return z_loc, z_scale


# ---------------------------- parameter init ------------------------------------


def xavier_uniform(key, out_features, in_features):
    """torch.nn.init.xavier_uniform_ on a (out, in) weight."""
    bound = math.sqrt(6.0 / (in_features + out_features))
    return jax.random.uniform(
        key, (out_features, in_features), jnp.float32, minval=-bound, maxval=bound
    )


def make_params(key, z_dim, hidden_dim, y_dim, x_dim):
    """Torch-layout params (weight: (out, in)); biases zeroed like my_initializer."""
    k_fcy, k_fcx, k_fc21, k_fc22 = jax.random.split(key, 4)
    H = hidden_dim
    return {
        "wy": xavier_uniform(k_fcy, H, y_dim),
        "by": jnp.zeros((H,), jnp.float32),
        "wx": xavier_uniform(k_fcx, H, x_dim),
        "bx": jnp.zeros((H,), jnp.float32),
        "w21": xavier_uniform(k_fc21, z_dim, 2 * H),
        "b21": jnp.zeros((z_dim,), jnp.float32),
        "w22": xavier_uniform(k_fc22, z_dim, 2 * H),
        "b22": jnp.zeros((z_dim,), jnp.float32),
    }


# ------------------------------- reference --------------------------------------


def encoder_reference(y, x, params):
    hy = y @ params["wy"].T + params["by"]
    hx = x @ params["wx"].T + params["bx"]
    h = jnp.concatenate([hy, hx], axis=1)
    for _ in range(3):
        h = _squish_softplus(h)
    z_loc = h @ params["w21"].T + params["b21"]
    z_scale = _squish_softplus(h @ params["w22"].T + params["b22"])
    return z_loc, z_scale


# --------------------------------- main ------------------------------------------


if __name__ == "__main__":
    z_dim, hidden_dim, y_dim, x_dim = 8, 32, 16, 12

    key = jax.random.PRNGKey(0)
    k_data, k_p, k_b = jax.random.split(key, 3)

    params = make_params(k_p, z_dim, hidden_dim, y_dim, x_dim)
    # The module zero-inits biases; perturb them here so the test actually
    # exercises the in-kernel bias adds (forward semantics are unchanged).
    kb = jax.random.split(k_b, 4)
    params["by"] = 0.1 * jax.random.normal(kb[0], (hidden_dim,), jnp.float32)
    params["bx"] = 0.1 * jax.random.normal(kb[1], (hidden_dim,), jnp.float32)
    params["b21"] = 0.1 * jax.random.normal(kb[2], (z_dim,), jnp.float32)
    params["b22"] = 0.1 * jax.random.normal(kb[3], (z_dim,), jnp.float32)

    packed = prepack_params(params)  # one-time, hoisted out of the hot path

    # Small batch (single grid step) and a non-multiple-of-128 batch (padding +
    # multi-step grid path) are both checked against the pure-JAX reference.
    for B in (16, 300):
        k_y, k_x = jax.random.split(jax.random.fold_in(k_data, B))
        y = jax.random.normal(k_y, (B, y_dim), jnp.float32)
        x = jax.random.normal(k_x, (B, x_dim), jnp.float32)

        z_loc, z_scale = encoder_forward(y, x, packed)
        jax.block_until_ready((z_loc, z_scale))

        ref_loc, ref_scale = encoder_reference(y, x, params)
        assert z_loc.shape == (B, z_dim) and z_scale.shape == (B, z_dim)
        assert jnp.allclose(z_loc, ref_loc, atol=2e-5, rtol=2e-5), float(
            jnp.max(jnp.abs(z_loc - ref_loc))
        )
        assert jnp.allclose(z_scale, ref_scale, atol=2e-5, rtol=2e-5), float(
            jnp.max(jnp.abs(z_scale - ref_scale))
        )

    print("KERNEL_OK")
</pallas_src>

<mosaic_0001>
module attributes {stable_mosaic.version = 11 : i64} {
  func.func @encoder_kernel(%arg0: i32, %arg1: memref<128x16xf32, #tpu.memory_space<vmem>>, %arg2: memref<128x12xf32, #tpu.memory_space<vmem>>, %arg3: memref<32x16xf32, #tpu.memory_space<vmem>>, %arg4: memref<32x12xf32, #tpu.memory_space<vmem>>, %arg5: memref<64x1xf32, #tpu.memory_space<vmem>>, %arg6: memref<16x64xf32, #tpu.memory_space<vmem>>, %arg7: memref<16x1xf32, #tpu.memory_space<vmem>>, %arg8: memref<16x128xf32, #tpu.memory_space<vmem>>) attributes {dimension_semantics = [#tpu.dimension_semantics<parallel>], iteration_bounds = array<i64: 1>, scalar_prefetch = 0 : i64, scratch_operands = 0 : i64, tpu.core_type = #tpu.core_type<tc>, window_params = [{transform_indices = @transform_0, window_bounds = array<i64: 128, 16>}, {transform_indices = @transform_1, window_bounds = array<i64: 128, 12>}, {pipeline_mode = #tpu.pipeline_mode<synchronous>, transform_indices = @transform_2, window_bounds = array<i64: 32, 16>}, {pipeline_mode = #tpu.pipeline_mode<synchronous>, transform_indices = @transform_3, window_bounds = array<i64: 32, 12>}, {pipeline_mode = #tpu.pipeline_mode<synchronous>, transform_indices = @transform_4, window_bounds = array<i64: 64, 1>}, {pipeline_mode = #tpu.pipeline_mode<synchronous>, transform_indices = @transform_5, window_bounds = array<i64: 16, 64>}, {pipeline_mode = #tpu.pipeline_mode<synchronous>, transform_indices = @transform_6, window_bounds = array<i64: 16, 1>}, {transform_indices = @transform_7, window_bounds = array<i64: 16, 128>}]} {
    %c0 = arith.constant 0 : index
    %c0_0 = arith.constant 0 : index
    %0 = vector.load %arg3[%c0, %c0_0] : memref<32x16xf32, #tpu.memory_space<vmem>>, vector<32x16xf32>
    %c0_1 = arith.constant 0 : index
    %c0_2 = arith.constant 0 : index
    %1 = vector.load %arg1[%c0_1, %c0_2] : memref<128x16xf32, #tpu.memory_space<vmem>>, vector<128x16xf32>
    %cst = arith.constant dense<0.000000e+00> : vector<32x128xf32>
    %2 = tpu.matmul %0, %1, %cst {dimension_numbers = #tpu.dot_dimension_numbers<[1], [1], [0], [0], [0, 0, 1, 0], [], []>} : vector<32x16xf32>, vector<128x16xf32>, vector<32x128xf32> -> vector<32x128xf32>
    %c0_3 = arith.constant 0 : index
    %c0_4 = arith.constant 0 : index
    %3 = vector.load %arg4[%c0_3, %c0_4] : memref<32x12xf32, #tpu.memory_space<vmem>>, vector<32x12xf32>
    %c0_5 = arith.constant 0 : index
    %c0_6 = arith.constant 0 : index
    %4 = vector.load %arg2[%c0_5, %c0_6] : memref<128x12xf32, #tpu.memory_space<vmem>>, vector<128x12xf32>
    %cst_7 = arith.constant dense<0.000000e+00> : vector<32x128xf32>
    %5 = tpu.matmul %3, %4, %cst_7 {dimension_numbers = #tpu.dot_dimension_numbers<[1], [1], [0], [0], [0, 0, 1, 0], [], []>} : vector<32x12xf32>, vector<128x12xf32>, vector<32x128xf32> -> vector<32x128xf32>
    %6 = tpu.concatenate %2, %5 in 0 : vector<32x128xf32>, vector<32x128xf32> -> vector<64x128xf32>
    %c0_8 = arith.constant 0 : index
    %c0_9 = arith.constant 0 : index
    %7 = vector.load %arg5[%c0_8, %c0_9] : memref<64x1xf32, #tpu.memory_space<vmem>>, vector<64x1xf32>
    %8 = vector.broadcast %7 : vector<64x1xf32> to vector<64x128xf32>
    %9 = arith.addf %6, %8 : vector<64x128xf32>
    %cst_10 = arith.constant 2.000000e+01 : f32
    %10 = vector.broadcast %cst_10 : f32 to vector<64x128xf32>
    %11 = arith.cmpf ogt, %9, %10 : vector<64x128xf32>
    %cst_11 = arith.constant 2.000000e+01 : f32
    %12 = vector.broadcast %cst_11 : f32 to vector<64x128xf32>
    %13 = arith.minimumf %9, %12 : vector<64x128xf32>
    %14 = math.exp %13 : vector<64x128xf32>
    %15 = math.log1p %14 : vector<64x128xf32>
    %16 = arith.select %11, %9, %15 : vector<64x128xi1>, vector<64x128xf32>
    %17 = math.sqrt %16 : vector<64x128xf32>
    %18 = math.sqrt %17 : vector<64x128xf32>
    %cst_12 = arith.constant 2.000000e+01 : f32
    %19 = vector.broadcast %cst_12 : f32 to vector<64x128xf32>
    %20 = arith.cmpf ogt, %18, %19 : vector<64x128xf32>
    %cst_13 = arith.constant 2.000000e+01 : f32
    %21 = vector.broadcast %cst_13 : f32 to vector<64x128xf32>
    %22 = arith.minimumf %18, %21 : vector<64x128xf32>
    %23 = math.exp %22 : vector<64x128xf32>
    %24 = math.log1p %23 : vector<64x128xf32>
    %25 = arith.select %20, %18, %24 : vector<64x128xi1>, vector<64x128xf32>
    %26 = math.sqrt %25 : vector<64x128xf32>
    %27 = math.sqrt %26 : vector<64x128xf32>
    %cst_14 = arith.constant 2.000000e+01 : f32
    %28 = vector.broadcast %cst_14 : f32 to vector<64x128xf32>
    %29 = arith.cmpf ogt, %27, %28 : vector<64x128xf32>
    %cst_15 = arith.constant 2.000000e+01 : f32
    %30 = vector.broadcast %cst_15 : f32 to vector<64x128xf32>
    %31 = arith.minimumf %27, %30 : vector<64x128xf32>
    %32 = math.exp %31 : vector<64x128xf32>
    %33 = math.log1p %32 : vector<64x128xf32>
    %34 = arith.select %29, %27, %33 : vector<64x128xi1>, vector<64x128xf32>
    %35 = math.sqrt %34 : vector<64x128xf32>
    %36 = math.sqrt %35 : vector<64x128xf32>
    %c0_16 = arith.constant 0 : index
    %c0_17 = arith.constant 0 : index
    %37 = vector.load %arg6[%c0_16, %c0_17] : memref<16x64xf32, #tpu.memory_space<vmem>>, vector<16x64xf32>
    %cst_18 = arith.constant dense<0.000000e+00> : vector<16x128xf32>
    %38 = tpu.matmul %37, %36, %cst_18 {dimension_numbers = #tpu.dot_dimension_numbers<[1], [0], [0], [1], [0, 0, 1, 1], [], []>} : vector<16x64xf32>, vector<64x128xf32>, vector<16x128xf32> -> vector<16x128xf32>
    %c0_19 = arith.constant 0 : index
    %c0_20 = arith.constant 0 : index
    %39 = vector.load %arg7[%c0_19, %c0_20] : memref<16x1xf32, #tpu.memory_space<vmem>>, vector<16x1xf32>
    %40 = vector.broadcast %39 : vector<16x1xf32> to vector<16x128xf32>
    %41 = arith.addf %38, %40 : vector<16x128xf32>
    %42 = vector.extract_strided_slice %41 {offsets = [0, 0], sizes = [8, 128], strides = [1, 1]} : vector<16x128xf32> to vector<8x128xf32>
    %c0_21 = arith.constant 0 : index
    %c0_22 = arith.constant 0 : index
    %43 = vector.load %arg8[%c0_21, %c0_22] : memref<16x128xf32, #tpu.memory_space<vmem>>, vector<8x128xf32>
    tpu.vector_store %arg8[%c0_21, %c0_22], %42 {strides = array<i32>} : memref<16x128xf32, #tpu.memory_space<vmem>>, vector<8x128xf32>,
    %44 = vector.extract_strided_slice %41 {offsets = [8, 0], sizes = [8, 128], strides = [1, 1]} : vector<16x128xf32> to vector<8x128xf32>
    %cst_23 = arith.constant 2.000000e+01 : f32
    %45 = vector.broadcast %cst_23 : f32 to vector<8x128xf32>
    %46 = arith.cmpf ogt, %44, %45 : vector<8x128xf32>
    %cst_24 = arith.constant 2.000000e+01 : f32
    %47 = vector.broadcast %cst_24 : f32 to vector<8x128xf32>
    %48 = arith.minimumf %44, %47 : vector<8x128xf32>
    %49 = math.exp %48 : vector<8x128xf32>
    %50 = math.log1p %49 : vector<8x128xf32>
    %51 = arith.select %46, %44, %50 : vector<8x128xi1>, vector<8x128xf32>
    %52 = math.sqrt %51 : vector<8x128xf32>
    %53 = math.sqrt %52 : vector<8x128xf32>
    %c8 = arith.constant 8 : index
    %c0_25 = arith.constant 0 : index
    %54 = vector.load %arg8[%c8, %c0_25] : memref<16x128xf32, #tpu.memory_space<vmem>>, vector<8x128xf32>
    tpu.vector_store %arg8[%c8, %c0_25], %53 {strides = array<i32>} : memref<16x128xf32, #tpu.memory_space<vmem>>, vector<8x128xf32>,
    return
  }
  func.func @transform_0(%arg0: i32) -> (i32, i32) {
    %c0_i32 = arith.constant 0 : i32
    %c0_i32_0 = arith.constant 0 : i32
    return %arg0, %c0_i32 : i32, i32
  }
  func.func @transform_1(%arg0: i32) -> (i32, i32) {
    %c0_i32 = arith.constant 0 : i32
    %c0_i32_0 = arith.constant 0 : i32
    return %arg0, %c0_i32 : i32, i32
  }
  func.func @transform_2(%arg0: i32) -> (i32, i32) {
    %c0_i32 = arith.constant 0 : i32
    %c0_i32_0 = arith.constant 0 : i32
    %c0_i32_1 = arith.constant 0 : i32
    return %c0_i32, %c0_i32_0 : i32, i32
  }
  func.func @transform_3(%arg0: i32) -> (i32, i32) {
    %c0_i32 = arith.constant 0 : i32
    %c0_i32_0 = arith.constant 0 : i32
    %c0_i32_1 = arith.constant 0 : i32
    return %c0_i32, %c0_i32_0 : i32, i32
  }
  func.func @transform_4(%arg0: i32) -> (i32, i32) {
    %c0_i32 = arith.constant 0 : i32
    %c0_i32_0 = arith.constant 0 : i32
    %c0_i32_1 = arith.constant 0 : i32
    return %c0_i32, %c0_i32_0 : i32, i32
  }
  func.func @transform_5(%arg0: i32) -> (i32, i32) {
    %c0_i32 = arith.constant 0 : i32
    %c0_i32_0 = arith.constant 0 : i32
    %c0_i32_1 = arith.constant 0 : i32
    return %c0_i32, %c0_i32_0 : i32, i32
  }
  func.func @transform_6(%arg0: i32) -> (i32, i32) {
    %c0_i32 = arith.constant 0 : i32
    %c0_i32_0 = arith.constant 0 : i32
    %c0_i32_1 = arith.constant 0 : i32
    return %c0_i32, %c0_i32_0 : i32, i32
  }
  func.func @transform_7(%arg0: i32) -> (i32, i32) {
    %c0_i32 = arith.constant 0 : i32
    %c0_i32_0 = arith.constant 0 : i32
    return %c0_i32, %arg0 : i32, i32
  }
}

</mosaic_0001>

<llo_original>
// kernel: encoder_forward.1
$region0: #{encoder_forward.1}
  #allocation0 [shape = 'u32[]', space=smem, size = 0x4, offset = 0x4, fixed_abs, tag = 'smem constant byte address 0x4 - core index']
  #allocation1 [shape = 'u32[72,128]{1,0:T(1,128)}', space=vmem, size = 0x9000, scoped, tag = 'internal scratch']
  %s0 = inlined_call_operand.vmem [shape: f32[128,16], index: 0, kind: input, shape index: {}]
  %s1 = inlined_call_operand.vmem [shape: f32[128,12], index: 1, kind: input, shape index: {}]
  %s2 = inlined_call_operand.vmem [shape: f32[32,16], index: 2, kind: input, shape index: {}]
  %s3 = inlined_call_operand.vmem [shape: f32[32,12], index: 3, kind: input, shape index: {}]
  %s4 = inlined_call_operand.vmem [shape: f32[64,1], index: 4, kind: input, shape index: {}]
  %s5 = inlined_call_operand.vmem [shape: f32[16,64], index: 5, kind: input, shape index: {}]
  %s6 = inlined_call_operand.vmem [shape: f32[16,1], index: 6, kind: input, shape index: {}]
  %s7 = inlined_call_operand.vmem [shape: f32[16,128], index: 7, kind: output, shape index: {}]
  %s8 = sld [smem:[#allocation0]]
  $region38: #{encoder_forward.1} parent=0
    _
  %s10 = ssub.s32 1, %s8
  %s11 = scalar_select 0, %s10, %s8
  // Predicated region
  $region2: #{encoder_forward.1} parent=0 // pred_check
    _
  $region3: #{encoder_forward.1} parent=0 // pred_check_branch
    %13 = sbr.rel (0) target = $region5
  $region4: #{encoder_forward.1} parent=0 // pred_region
    _
  $region5: #{encoder_forward.1} parent=0 // pred_fallthru
    _
  // Predicated region
  $region6: #{encoder_forward.1} parent=0 // pred_check
    _
  $region7: #{encoder_forward.1} parent=0 // pred_check_branch
    %15 = sbr.rel (0) target = $region9
  $region8: #{encoder_forward.1} parent=0 // pred_region
    _
  $region9: #{encoder_forward.1} parent=0 // pred_fallthru
    _
  // Predicated region
  $region10: #{encoder_forward.1} parent=0 // pred_check
    _
  $region11: #{encoder_forward.1} parent=0 // pred_check_branch
    %17 = sbr.rel (0) target = $region13
  $region12: #{encoder_forward.1} parent=0 // pred_region
    _
  $region13: #{encoder_forward.1} parent=0 // pred_fallthru
    _
  // Predicated region
  $region14: #{encoder_forward.1} parent=0 // pred_check
    _
  $region15: #{encoder_forward.1} parent=0 // pred_check_branch
    %19 = sbr.rel (0) target = $region17
  $region16: #{encoder_forward.1} parent=0 // pred_region
    _
  $region17: #{encoder_forward.1} parent=0 // pred_fallthru
    _
  // Predicated region
  $region18: #{encoder_forward.1} parent=0 // pred_check
    _
  $region19: #{encoder_forward.1} parent=0 // pred_check_branch
    %21 = sbr.rel (0) target = $region21
  $region20: #{encoder_forward.1} parent=0 // pred_region
    _
  $region21: #{encoder_forward.1} parent=0 // pred_fallthru
    _
  // Predicated region
  $region22: #{encoder_forward.1} parent=0 // pred_check
    _
  $region23: #{encoder_forward.1} parent=0 // pred_check_branch
    %23 = sbr.rel (0) target = $region25
  $region24: #{encoder_forward.1} parent=0 // pred_region
    _
  $region25: #{encoder_forward.1} parent=0 // pred_fallthru
    _
  // Predicated region
  $region26: #{encoder_forward.1} parent=0 // pred_check
    _
  $region27: #{encoder_forward.1} parent=0 // pred_check_branch
    %25 = sbr.rel (0) target = $region29
  $region28: #{encoder_forward.1} parent=0 // pred_region
    _
  $region29: #{encoder_forward.1} parent=0 // pred_fallthru
    _
  %v26 = vld [vmem:[%s2] sm:$0xff]
  %v27 = vld [vmem:[%s2 + $0x8] sm:$0xff]
  %v28 = vld [vmem:[%s2 + $0x10] sm:$0xff]
  %v29 = vld [vmem:[%s2 + $0x18] sm:$0xff]
  %v30 = vld [vmem:[%s0] sm:$0xff]
  %v31 = vld [vmem:[%s0 + $0x8] sm:$0xff]
  %v32 = vld [vmem:[%s0 + $0x10] sm:$0xff]
  %v33 = vld [vmem:[%s0 + $0x18] sm:$0xff]
  %v34 = vld [vmem:[%s0 + $0x20] sm:$0xff]
  %v35 = vld [vmem:[%s0 + $0x28] sm:$0xff]
  %v36 = vld [vmem:[%s0 + $0x30] sm:$0xff]
  %v37 = vld [vmem:[%s0 + $0x38] sm:$0xff]
  %v38 = vld [vmem:[%s0 + $0x40] sm:$0xff]
  %v39 = vld [vmem:[%s0 + $0x48] sm:$0xff]
  %v40 = vld [vmem:[%s0 + $0x50] sm:$0xff]
  %v41 = vld [vmem:[%s0 + $0x58] sm:$0xff]
  %v42 = vld [vmem:[%s0 + $0x60] sm:$0xff]
  %v43 = vld [vmem:[%s0 + $0x68] sm:$0xff]
  %v44 = vld [vmem:[%s0 + $0x70] sm:$0xff]
  %v45 = vld [vmem:[%s0 + $0x78] sm:$0xff]
  %vm46 = vcmask 130048
  %v48 = vsel %vm46, %v26, 0
  %v51 = vsel %vm46, %v27, 0
  %v54 = vsel %vm46, %v28, 0
  %v57 = vsel %vm46, %v29, 0
  %v60 = vsel %vm46, %v30, 0
  %v63 = vsel %vm46, %v31, 0
  %v66 = vsel %vm46, %v32, 0
  %v69 = vsel %vm46, %v33, 0
  %v72 = vsel %vm46, %v34, 0
  %v75 = vsel %vm46, %v35, 0
  %v78 = vsel %vm46, %v36, 0
  %v81 = vsel %vm46, %v37, 0
  %v84 = vsel %vm46, %v38, 0
  %v87 = vsel %vm46, %v39, 0
  %v90 = vsel %vm46, %v40, 0
  %v93 = vsel %vm46, %v41, 0
  %v96 = vsel %vm46, %v42, 0
  %v99 = vsel %vm46, %v43, 0
  %v102 = vsel %vm46, %v44, 0
  %v105 = vsel %vm46, %v45, 0
  %107 = vmatpush.xpose.msra.mxu0 %v105
  %108 = vmatpush.xpose.msra.mxu0 %v102
  %109 = vmatpush.xpose.msra.mxu0 %v99
  %110 = vmatpush.xpose.msra.mxu0 %v96
  %111 = vmatpush.xpose.msra.mxu0 %v93
  %112 = vmatpush.xpose.msra.mxu0 %v90
  %113 = vmatpush.xpose.msra.mxu0 %v87
  %114 = vmatpush.xpose.msra.mxu0 %v84
  %115 = vmatpush.xpose.msra.mxu0 %v81
  %116 = vmatpush.xpose.msra.mxu0 %v78
  %117 = vmatpush.xpose.msra.mxu0 %v75
  %118 = vmatpush.xpose.msra.mxu0 %v72
  %119 = vmatpush.xpose.msra.mxu0 %v69
  %120 = vmatpush.xpose.msra.mxu0 %v66
  %121 = vmatpush.xpose.msra.mxu0 %v63
  %122 = vmatpush.xpose.msra.mxu0 %v60
  %123 = vmatmul.f32.gmra.mxu0 %v48
  %v124 = vpop.f32.mrf.mxu0
  %v125 = vadd.f32 0.0, %v124
  %126 = vmatmul.f32.gmra.mxu0 %v51
  %v127 = vpop.f32.mrf.mxu0
  %v128 = vadd.f32 0.0, %v127
  %129 = vmatmul.f32.gmra.mxu0 %v54
  %v130 = vpop.f32.mrf.mxu0
  %v131 = vadd.f32 0.0, %v130
  %132 = vmatmul.f32.gmra.mxu0 %v57
  %v133 = vpop.f32.mrf.mxu0
  %v134 = vadd.f32 0.0, %v133
  %135 = vdwg.mxu0
  %v136 = vld [vmem:[%s3] sm:$0xff]
  %v137 = vld [vmem:[%s3 + $0x8] sm:$0xff]
  %v138 = vld [vmem:[%s3 + $0x10] sm:$0xff]
  %v139 = vld [vmem:[%s3 + $0x18] sm:$0xff]
  %v140 = vld [vmem:[%s1] sm:$0xff]
  %v141 = vld [vmem:[%s1 + $0x8] sm:$0xff]
  %v142 = vld [vmem:[%s1 + $0x10] sm:$0xff]
  %v143 = vld [vmem:[%s1 + $0x18] sm:$0xff]
  %v144 = vld [vmem:[%s1 + $0x20] sm:$0xff]
  %v145 = vld [vmem:[%s1 + $0x28] sm:$0xff]
  %v146 = vld [vmem:[%s1 + $0x30] sm:$0xff]
  %v147 = vld [vmem:[%s1 + $0x38] sm:$0xff]
  %v148 = vld [vmem:[%s1 + $0x40] sm:$0xff]
  %v149 = vld [vmem:[%s1 + $0x48] sm:$0xff]
  %v150 = vld [vmem:[%s1 + $0x50] sm:$0xff]
  %v151 = vld [vmem:[%s1 + $0x58] sm:$0xff]
  %v152 = vld [vmem:[%s1 + $0x60] sm:$0xff]
  %v153 = vld [vmem:[%s1 + $0x68] sm:$0xff]
  %v154 = vld [vmem:[%s1 + $0x70] sm:$0xff]
  %v155 = vld [vmem:[%s1 + $0x78] sm:$0xff]
  %vm156 = vcmask 97280
  %v158 = vsel %vm156, %v136, 0
  %v161 = vsel %vm156, %v137, 0
  %v164 = vsel %vm156, %v138, 0
  %v167 = vsel %vm156, %v139, 0
  %v170 = vsel %vm156, %v140, 0
  %v173 = vsel %vm156, %v141, 0
  %v176 = vsel %vm156, %v142, 0
  %v179 = vsel %vm156, %v143, 0
  %v182 = vsel %vm156, %v144, 0
  %v185 = vsel %vm156, %v145, 0
  %v188 = vsel %vm156, %v146, 0
  %v191 = vsel %vm156, %v147, 0
  %v194 = vsel %vm156, %v148, 0
  %v197 = vsel %vm156, %v149, 0
  %v200 = vsel %vm156, %v150, 0
  %v203 = vsel %vm156, %v151, 0
  %v206 = vsel %vm156, %v152, 0
  %v209 = vsel %vm156, %v153, 0
  %v212 = vsel %vm156, %v154, 0
  %v215 = vsel %vm156, %v155, 0
  %217 = vmatpush.xpose.msra.mxu0 %v215
  %218 = vmatpush.xpose.msra.mxu0 %v212
  %219 = vmatpush.xpose.msra.mxu0 %v209
  %220 = vmatpush.xpose.msra.mxu0 %v206
  %221 = vmatpush.xpose.msra.mxu0 %v203
  %222 = vmatpush.xpose.msra.mxu0 %v200
  %223 = vmatpush.xpose.msra.mxu0 %v197
  %224 = vmatpush.xpose.msra.mxu0 %v194
  %225 = vmatpush.xpose.msra.mxu0 %v191
  %226 = vmatpush.xpose.msra.mxu0 %v188
  %227 = vmatpush.xpose.msra.mxu0 %v185
  %228 = vmatpush.xpose.msra.mxu0 %v182
  %229 = vmatpush.xpose.msra.mxu0 %v179
  %230 = vmatpush.xpose.msra.mxu0 %v176
  %231 = vmatpush.xpose.msra.mxu0 %v173
  %232 = vmatpush.xpose.msra.mxu0 %v170
  %233 = vmatmul.f32.gmra.mxu0 %v158
  %v234 = vpop.f32.mrf.mxu0
  %v235 = vadd.f32 0.0, %v234
  %236 = vmatmul.f32.gmra.mxu0 %v161
  %v237 = vpop.f32.mrf.mxu0
  %v238 = vadd.f32 0.0, %v237
  %239 = vmatmul.f32.gmra.mxu0 %v164
  %v240 = vpop.f32.mrf.mxu0
  %v241 = vadd.f32 0.0, %v240
  %242 = vmatmul.f32.gmra.mxu0 %v167
  %v243 = vpop.f32.mrf.mxu0
  %v244 = vadd.f32 0.0, %v243
  %245 = vdwg.mxu0
  %v246 = vld [vmem:[%s4] sm:$0xff]
  %v247 = vld [vmem:[%s4 + $0x8] sm:$0xff]
  %v248 = vld [vmem:[%s4 + $0x10] sm:$0xff]
  %v249 = vld [vmem:[%s4 + $0x18] sm:$0xff]
  %v250 = vld [vmem:[%s4 + $0x20] sm:$0xff]
  %v251 = vld [vmem:[%s4 + $0x28] sm:$0xff]
  %v252 = vld [vmem:[%s4 + $0x30] sm:$0xff]
  %v253 = vld [vmem:[%s4 + $0x38] sm:$0xff]
  %255 = vset.pattern.permute.xlu0 0
  %256 = vperm.xlu0 %255, %v246
  %v257 = vpop.permute.xlu0 %256
  %260 = vset.pattern.permute.xlu0 0
  %261 = vperm.xlu0 %260, %v247
  %v262 = vpop.permute.xlu0 %261
  %265 = vset.pattern.permute.xlu0 0
  %266 = vperm.xlu0 %265, %v248
  %v267 = vpop.permute.xlu0 %266
  %270 = vset.pattern.permute.xlu0 0
  %271 = vperm.xlu0 %270, %v249
  %v272 = vpop.permute.xlu0 %271
  %275 = vset.pattern.permute.xlu0 0
  %276 = vperm.xlu0 %275, %v250
  %v277 = vpop.permute.xlu0 %276
  %280 = vset.pattern.permute.xlu0 0
  %281 = vperm.xlu0 %280, %v251
  %v282 = vpop.permute.xlu0 %281
  %285 = vset.pattern.permute.xlu0 0
  %286 = vperm.xlu0 %285, %v252
  %v287 = vpop.permute.xlu0 %286
  %290 = vset.pattern.permute.xlu0 0
  %291 = vperm.xlu0 %290, %v253
  %v292 = vpop.permute.xlu0 %291
  %v294 = vadd.f32 %v125, %v257
  %v295 = vadd.f32 %v128, %v262
  %v296 = vadd.f32 %v131, %v267
  %v297 = vadd.f32 %v134, %v272
  %v298 = vadd.f32 %v235, %v277
  %v299 = vadd.f32 %v238, %v282
  %v300 = vadd.f32 %v241, %v287
  %v301 = vadd.f32 %v244, %v292
  %vm302 = vcmp.gt.f32.partialorder %v294, 20.0
  %vm303 = vcmp.gt.f32.partialorder %v295, 20.0
  %vm304 = vcmp.gt.f32.partialorder %v296, 20.0
  %vm305 = vcmp.gt.f32.partialorder %v297, 20.0
  %vm306 = vcmp.gt.f32.partialorder %v298, 20.0
  %vm307 = vcmp.gt.f32.partialorder %v299, 20.0
  %vm308 = vcmp.gt.f32.partialorder %v300, 20.0
  %vm309 = vcmp.gt.f32.partialorder %v301, 20.0
  %v310 = vmin.f32 %v294, 20.0
  %v311 = vmin.f32 %v295, 20.0
  %v312 = vmin.f32 %v296, 20.0
  %v313 = vmin.f32 %v297, 20.0
  %v314 = vmin.f32 %v298, 20.0
  %v315 = vmin.f32 %v299, 20.0
  %v316 = vmin.f32 %v300, 20.0
  %v317 = vmin.f32 %v301, 20.0
  %v318 = vmul.f32 %v310, 1.442695
  %v319 = vpow.pop %v318
  %v320 = vmul.f32 %v311, 1.442695
  %v321 = vpow.pop %v320
  %v322 = vmul.f32 %v312, 1.442695
  %v323 = vpow.pop %v322
  %v324 = vmul.f32 %v313, 1.442695
  %v325 = vpow.pop %v324
  %v326 = vmul.f32 %v314, 1.442695
  %v327 = vpow.pop %v326
  %v328 = vmul.f32 %v315, 1.442695
  %v329 = vpow.pop %v328
  %v330 = vmul.f32 %v316, 1.442695
  %v331 = vpow.pop %v330
  %v332 = vmul.f32 %v317, 1.442695
  %v333 = vpow.pop %v332
  %v334 = vadd.f32 %v319, 1.0
  %v335 = vlog2.pop %v334
  %v336 = vmul.f32 %v335, 0.6931472
  %v337 = vmul.f32 -0.5, %v319
  %v338 = vadd.f32 %v337, 1.0
  %v339 = vmul.f32 %v338, %v319
  %v340 = vand.u32 2147483647, %v319
  %vm341 = vcmp.lt.f32.partialorder %v340, 0.0004427343
  %v342 = vsel %vm341, %v339, %v336
  %v343 = vadd.f32 %v321, 1.0
  %v344 = vlog2.pop %v343
  %v345 = vmul.f32 %v344, 0.6931472
  %v346 = vmul.f32 -0.5, %v321
  %v347 = vadd.f32 %v346, 1.0
  %v348 = vmul.f32 %v347, %v321
  %v349 = vand.u32 2147483647, %v321
  %vm350 = vcmp.lt.f32.partialorder %v349, 0.0004427343
  %v351 = vsel %vm350, %v348, %v345
  %v352 = vadd.f32 %v323, 1.0
  %v353 = vlog2.pop %v352
  %v354 = vmul.f32 %v353, 0.6931472
  %v355 = vmul.f32 -0.5, %v323
  %v356 = vadd.f32 %v355, 1.0
  %v357 = vmul.f32 %v356, %v323
  %v358 = vand.u32 2147483647, %v323
  %vm359 = vcmp.lt.f32.partialorder %v358, 0.0004427343
  %v360 = vsel %vm359, %v357, %v354
  %v361 = vadd.f32 %v325, 1.0
  %v362 = vlog2.pop %v361
  %v363 = vmul.f32 %v362, 0.6931472
  %v364 = vmul.f32 -0.5, %v325
  %v365 = vadd.f32 %v364, 1.0
  %v366 = vmul.f32 %v365, %v325
  %v367 = vand.u32 2147483647, %v325
  %vm368 = vcmp.lt.f32.partialorder %v367, 0.0004427343
  %v369 = vsel %vm368, %v366, %v363
  %v370 = vadd.f32 %v327, 1.0
  %v371 = vlog2.pop %v370
  %v372 = vmul.f32 %v371, 0.6931472
  %v373 = vmul.f32 -0.5, %v327
  %v374 = vadd.f32 %v373, 1.0
  %v375 = vmul.f32 %v374, %v327
  %v376 = vand.u32 2147483647, %v327
  %vm377 = vcmp.lt.f32.partialorder %v376, 0.0004427343
  %v378 = vsel %vm377, %v375, %v372
  %v379 = vadd.f32 %v329, 1.0
  %v380 = vlog2.pop %v379
  %v381 = vmul.f32 %v380, 0.6931472
  %v382 = vmul.f32 -0.5, %v329
  %v383 = vadd.f32 %v382, 1.0
  %v384 = vmul.f32 %v383, %v329
  %v385 = vand.u32 2147483647, %v329
  %vm386 = vcmp.lt.f32.partialorder %v385, 0.0004427343
  %v387 = vsel %vm386, %v384, %v381
  %v388 = vadd.f32 %v331, 1.0
  %v389 = vlog2.pop %v388
  %v390 = vmul.f32 %v389, 0.6931472
  %v391 = vmul.f32 -0.5, %v331
  %v392 = vadd.f32 %v391, 1.0
  %v393 = vmul.f32 %v392, %v331
  %v394 = vand.u32 2147483647, %v331
  %vm395 = vcmp.lt.f32.partialorder %v394, 0.0004427343
  %v396 = vsel %vm395, %v393, %v390
  %v397 = vadd.f32 %v333, 1.0
  %v398 = vlog2.pop %v397
  %v399 = vmul.f32 %v398, 0.6931472
  %v400 = vmul.f32 -0.5, %v333
  %v401 = vadd.f32 %v400, 1.0
  %v402 = vmul.f32 %v401, %v333
  %v403 = vand.u32 2147483647, %v333
  %vm404 = vcmp.lt.f32.partialorder %v403, 0.0004427343
  %v405 = vsel %vm404, %v402, %v399
  %v406 = vsel %vm302, %v294, %v342
  %v407 = vsel %vm303, %v295, %v351
  %v408 = vsel %vm304, %v296, %v360
  %v409 = vsel %vm305, %v297, %v369
  %v410 = vsel %vm306, %v298, %v378
  %v411 = vsel %vm307, %v299, %v387
  %v412 = vsel %vm308, %v300, %v396
  %v413 = vsel %vm309, %v301, %v405
  %v414 = vrsqrt.pop %v406
  %v415 = vmul.f32 %v414, %v406
  %v416 = vmul.f32 %v415, %v414
  %v417 = vmul.f32 0.5, %v416
  %v418 = vsub.f32 1.5, %v417
  %v419 = vmul.f32 %v414, %v418
  %v420 = vmul.f32 %v406, %v419
  %vm421 = vcmp.eq.f32.partialorder %v406, inf
  %v422 = vsel %vm421, %v406, %v420
  %vm423 = vcmp.eq.f32.partialorder %v406, 0.0
  %v424 = vand.u32 %v406, 2147483648
  %v425 = vsel %vm423, %v424, %v422
  %v426 = vrsqrt.pop %v407
  %v427 = vmul.f32 %v426, %v407
  %v428 = vmul.f32 %v427, %v426
  %v429 = vmul.f32 0.5, %v428
  %v430 = vsub.f32 1.5, %v429
  %v431 = vmul.f32 %v426, %v430
  %v432 = vmul.f32 %v407, %v431
  %vm433 = vcmp.eq.f32.partialorder %v407, inf
  %v434 = vsel %vm433, %v407, %v432
  %vm435 = vcmp.eq.f32.partialorder %v407, 0.0
  %v436 = vand.u32 %v407, 2147483648
  %v437 = vsel %vm435, %v436, %v434
  %v438 = vrsqrt.pop %v408
  %v439 = vmul.f32 %v438, %v408
  %v440 = vmul.f32 %v439, %v438
  %v441 = vmul.f32 0.5, %v440
  %v442 = vsub.f32 1.5, %v441
  %v443 = vmul.f32 %v438, %v442
  %v444 = vmul.f32 %v408, %v443
  %vm445 = vcmp.eq.f32.partialorder %v408, inf
  %v446 = vsel %vm445, %v408, %v444
  %vm447 = vcmp.eq.f32.partialorder %v408, 0.0
  %v448 = vand.u32 %v408, 2147483648
  %v449 = vsel %vm447, %v448, %v446
  %v450 = vrsqrt.pop %v409
  %v451 = vmul.f32 %v450, %v409
  %v452 = vmul.f32 %v451, %v450
  %v453 = vmul.f32 0.5, %v452
  %v454 = vsub.f32 1.5, %v453
  %v455 = vmul.f32 %v450, %v454
  %v456 = vmul.f32 %v409, %v455
  %vm457 = vcmp.eq.f32.partialorder %v409, inf
  %v458 = vsel %vm457, %v409, %v456
  %vm459 = vcmp.eq.f32.partialorder %v409, 0.0
  %v460 = vand.u32 %v409, 2147483648
  %v461 = vsel %vm459, %v460, %v458
  %v462 = vrsqrt.pop %v410
  %v463 = vmul.f32 %v462, %v410
  %v464 = vmul.f32 %v463, %v462
  %v465 = vmul.f32 0.5, %v464
  %v466 = vsub.f32 1.5, %v465
  %v467 = vmul.f32 %v462, %v466
  %v468 = vmul.f32 %v410, %v467
  %vm469 = vcmp.eq.f32.partialorder %v410, inf
  %v470 = vsel %vm469, %v410, %v468
  %vm471 = vcmp.eq.f32.partialorder %v410, 0.0
  %v472 = vand.u32 %v410, 2147483648
  %v473 = vsel %vm471, %v472, %v470
  %v474 = vrsqrt.pop %v411
  %v475 = vmul.f32 %v474, %v411
  %v476 = vmul.f32 %v475, %v474
  %v477 = vmul.f32 0.5, %v476
  %v478 = vsub.f32 1.5, %v477
  %v479 = vmul.f32 %v474, %v478
  %v480 = vmul.f32 %v411, %v479
  %vm481 = vcmp.eq.f32.partialorder %v411, inf
  %v482 = vsel %vm481, %v411, %v480
  %vm483 = vcmp.eq.f32.partialorder %v411, 0.0
  %v484 = vand.u32 %v411, 2147483648
  %v485 = vsel %vm483, %v484, %v482
  %v486 = vrsqrt.pop %v412
  %v487 = vmul.f32 %v486, %v412
  %v488 = vmul.f32 %v487, %v486
  %v489 = vmul.f32 0.5, %v488
  %v490 = vsub.f32 1.5, %v489
  %v491 = vmul.f32 %v486, %v490
  %v492 = vmul.f32 %v412, %v491
  %vm493 = vcmp.eq.f32.partialorder %v412, inf
  %v494 = vsel %vm493, %v412, %v492
  %vm495 = vcmp.eq.f32.partialorder %v412, 0.0
  %v496 = vand.u32 %v412, 2147483648
  %v497 = vsel %vm495, %v496, %v494
  %v498 = vrsqrt.pop %v413
  %v499 = vmul.f32 %v498, %v413
  %v500 = vmul.f32 %v499, %v498
  %v501 = vmul.f32 0.5, %v500
  %v502 = vsub.f32 1.5, %v501
  %v503 = vmul.f32 %v498, %v502
  %v504 = vmul.f32 %v413, %v503
  %vm505 = vcmp.eq.f32.partialorder %v413, inf
  %v506 = vsel %vm505, %v413, %v504
  %vm507 = vcmp.eq.f32.partialorder %v413, 0.0
  %v508 = vand.u32 %v413, 2147483648
  %v509 = vsel %vm507, %v508, %v506
  %v510 = vrsqrt.pop %v425
  %v511 = vmul.f32 %v510, %v425
  %v512 = vmul.f32 %v511, %v510
  %v513 = vmul.f32 0.5, %v512
  %v514 = vsub.f32 1.5, %v513
  %v515 = vmul.f32 %v510, %v514
  %v516 = vmul.f32 %v425, %v515
  %vm517 = vcmp.eq.f32.partialorder %v425, inf
  %v518 = vsel %vm517, %v425, %v516
  %vm519 = vcmp.eq.f32.partialorder %v425, 0.0
  %v520 = vand.u32 %v425, 2147483648
  %v521 = vsel %vm519, %v520, %v518
  %v522 = vrsqrt.pop %v437
  %v523 = vmul.f32 %v522, %v437
  %v524 = vmul.f32 %v523, %v522
  %v525 = vmul.f32 0.5, %v524
  %v526 = vsub.f32 1.5, %v525
  %v527 = vmul.f32 %v522, %v526
  %v528 = vmul.f32 %v437, %v527
  %vm529 = vcmp.eq.f32.partialorder %v437, inf
  %v530 = vsel %vm529, %v437, %v528
  %vm531 = vcmp.eq.f32.partialorder %v437, 0.0
  %v532 = vand.u32 %v437, 2147483648
  %v533 = vsel %vm531, %v532, %v530
  %v534 = vrsqrt.pop %v449
  %v535 = vmul.f32 %v534, %v449
  %v536 = vmul.f32 %v535, %v534
  %v537 = vmul.f32 0.5, %v536
  %v538 = vsub.f32 1.5, %v537
  %v539 = vmul.f32 %v534, %v538
  %v540 = vmul.f32 %v449, %v539
  %vm541 = vcmp.eq.f32.partialorder %v449, inf
  %v542 = vsel %vm541, %v449, %v540
  %vm543 = vcmp.eq.f32.partialorder %v449, 0.0
  %v544 = vand.u32 %v449, 2147483648
  %v545 = vsel %vm543, %v544, %v542
  %v546 = vrsqrt.pop %v461
  %v547 = vmul.f32 %v546, %v461
  %v548 = vmul.f32 %v547, %v546
  %v549 = vmul.f32 0.5, %v548
  %v550 = vsub.f32 1.5, %v549
  %v551 = vmul.f32 %v546, %v550
  %v552 = vmul.f32 %v461, %v551
  %vm553 = vcmp.eq.f32.partialorder %v461, inf
  %v554 = vsel %vm553, %v461, %v552
  %vm555 = vcmp.eq.f32.partialorder %v461, 0.0
  %v556 = vand.u32 %v461, 2147483648
  %v557 = vsel %vm555, %v556, %v554
  %v558 = vrsqrt.pop %v473
  %v559 = vmul.f32 %v558, %v473
  %v560 = vmul.f32 %v559, %v558
  %v561 = vmul.f32 0.5, %v560
  %v562 = vsub.f32 1.5, %v561
  %v563 = vmul.f32 %v558, %v562
  %v564 = vmul.f32 %v473, %v563
  %vm565 = vcmp.eq.f32.partialorder %v473, inf
  %v566 = vsel %vm565, %v473, %v564
  %vm567 = vcmp.eq.f32.partialorder %v473, 0.0
  %v568 = vand.u32 %v473, 2147483648
  %v569 = vsel %vm567, %v568, %v566
  %v570 = vrsqrt.pop %v485
  %v571 = vmul.f32 %v570, %v485
  %v572 = vmul.f32 %v571, %v570
  %v573 = vmul.f32 0.5, %v572
  %v574 = vsub.f32 1.5, %v573
  %v575 = vmul.f32 %v570, %v574
  %v576 = vmul.f32 %v485, %v575
  %vm577 = vcmp.eq.f32.partialorder %v485, inf
  %v578 = vsel %vm577, %v485, %v576
  %vm579 = vcmp.eq.f32.partialorder %v485, 0.0
  %v580 = vand.u32 %v485, 2147483648
  %v581 = vsel %vm579, %v580, %v578
  %v582 = vrsqrt.pop %v497
  %v583 = vmul.f32 %v582, %v497
  %v584 = vmul.f32 %v583, %v582
  %v585 = vmul.f32 0.5, %v584
  %v586 = vsub.f32 1.5, %v585
  %v587 = vmul.f32 %v582, %v586
  %v588 = vmul.f32 %v497, %v587
  %vm589 = vcmp.eq.f32.partialorder %v497, inf
  %v590 = vsel %vm589, %v497, %v588
  %vm591 = vcmp.eq.f32.partialorder %v497, 0.0
  %v592 = vand.u32 %v497, 2147483648
  %v593 = vsel %vm591, %v592, %v590
  %v594 = vrsqrt.pop %v509
  %v595 = vmul.f32 %v594, %v509
  %v596 = vmul.f32 %v595, %v594
  %v597 = vmul.f32 0.5, %v596
  %v598 = vsub.f32 1.5, %v597
  %v599 = vmul.f32 %v594, %v598
  %v600 = vmul.f32 %v509, %v599
  %vm601 = vcmp.eq.f32.partialorder %v509, inf
  %v602 = vsel %vm601, %v509, %v600
  %vm603 = vcmp.eq.f32.partialorder %v509, 0.0
  %v604 = vand.u32 %v509, 2147483648
  %v605 = vsel %vm603, %v604, %v602
  %vm606 = vcmp.gt.f32.partialorder %v521, 20.0
  %vm607 = vcmp.gt.f32.partialorder %v533, 20.0
  %vm608 = vcmp.gt.f32.partialorder %v545, 20.0
  %vm609 = vcmp.gt.f32.partialorder %v557, 20.0
  %vm610 = vcmp.gt.f32.partialorder %v569, 20.0
  %vm611 = vcmp.gt.f32.partialorder %v581, 20.0
  %vm612 = vcmp.gt.f32.partialorder %v593, 20.0
  %vm613 = vcmp.gt.f32.partialorder %v605, 20.0
  %v614 = vmin.f32 %v521, 20.0
  %v615 = vmin.f32 %v533, 20.0
  %v616 = vmin.f32 %v545, 20.0
  %v617 = vmin.f32 %v557, 20.0
  %v618 = vmin.f32 %v569, 20.0
  %v619 = vmin.f32 %v581, 20.0
  %v620 = vmin.f32 %v593, 20.0
  %v621 = vmin.f32 %v605, 20.0
  %v622 = vmul.f32 %v614, 1.442695
  %v623 = vpow.pop %v622
  %v624 = vmul.f32 %v615, 1.442695
  %v625 = vpow.pop %v624
  %v626 = vmul.f32 %v616, 1.442695
  %v627 = vpow.pop %v626
  %v628 = vmul.f32 %v617, 1.442695
  %v629 = vpow.pop %v628
  %v630 = vmul.f32 %v618, 1.442695
  %v631 = vpow.pop %v630
  %v632 = vmul.f32 %v619, 1.442695
  %v633 = vpow.pop %v632
  %v634 = vmul.f32 %v620, 1.442695
  %v635 = vpow.pop %v634
  %v636 = vmul.f32 %v621, 1.442695
  %v637 = vpow.pop %v636
  %v638 = vadd.f32 %v623, 1.0
  %v639 = vlog2.pop %v638
  %v640 = vmul.f32 %v639, 0.6931472
  %v641 = vmul.f32 -0.5, %v623
  %v642 = vadd.f32 %v641, 1.0
  %v643 = vmul.f32 %v642, %v623
  %v644 = vand.u32 2147483647, %v623
  %vm645 = vcmp.lt.f32.partialorder %v644, 0.0004427343
  %v646 = vsel %vm645, %v643, %v640
  %v647 = vadd.f32 %v625, 1.0
  %v648 = vlog2.pop %v647
  %v649 = vmul.f32 %v648, 0.6931472
  %v650 = vmul.f32 -0.5, %v625
  %v651 = vadd.f32 %v650, 1.0
  %v652 = vmul.f32 %v651, %v625
  %v653 = vand.u32 2147483647, %v625
  %vm654 = vcmp.lt.f32.partialorder %v653, 0.0004427343
  %v655 = vsel %vm654, %v652, %v649
  %v656 = vadd.f32 %v627, 1.0
  %v657 = vlog2.pop %v656
  %v658 = vmul.f32 %v657, 0.6931472
  %v659 = vmul.f32 -0.5, %v627
  %v660 = vadd.f32 %v659, 1.0
  %v661 = vmul.f32 %v660, %v627
  %v662 = vand.u32 2147483647, %v627
  %vm663 = vcmp.lt.f32.partialorder %v662, 0.0004427343
  %v664 = vsel %vm663, %v661, %v658
  %v665 = vadd.f32 %v629, 1.0
  %v666 = vlog2.pop %v665
  %v667 = vmul.f32 %v666, 0.6931472
  %v668 = vmul.f32 -0.5, %v629
  %v669 = vadd.f32 %v668, 1.0
  %v670 = vmul.f32 %v669, %v629
  %v671 = vand.u32 2147483647, %v629
  %vm672 = vcmp.lt.f32.partialorder %v671, 0.0004427343
  %v673 = vsel %vm672, %v670, %v667
  %v674 = vadd.f32 %v631, 1.0
  %v675 = vlog2.pop %v674
  %v676 = vmul.f32 %v675, 0.6931472
  %v677 = vmul.f32 -0.5, %v631
  %v678 = vadd.f32 %v677, 1.0
  %v679 = vmul.f32 %v678, %v631
  %v680 = vand.u32 2147483647, %v631
  %vm681 = vcmp.lt.f32.partialorder %v680, 0.0004427343
  %v682 = vsel %vm681, %v679, %v676
  %v683 = vadd.f32 %v633, 1.0
  %v684 = vlog2.pop %v683
  %v685 = vmul.f32 %v684, 0.6931472
  %v686 = vmul.f32 -0.5, %v633
  %v687 = vadd.f32 %v686, 1.0
  %v688 = vmul.f32 %v687, %v633
  %v689 = vand.u32 2147483647, %v633
  %vm690 = vcmp.lt.f32.partialorder %v689, 0.0004427343
  %v691 = vsel %vm690, %v688, %v685
  %v692 = vadd.f32 %v635, 1.0
  %v693 = vlog2.pop %v692
  %v694 = vmul.f32 %v693, 0.6931472
  %v695 = vmul.f32 -0.5, %v635
  %v696 = vadd.f32 %v695, 1.0
  %v697 = vmul.f32 %v696, %v635
  %v698 = vand.u32 2147483647, %v635
  %vm699 = vcmp.lt.f32.partialorder %v698, 0.0004427343
  %v700 = vsel %vm699, %v697, %v694
  %v701 = vadd.f32 %v637, 1.0
  %v702 = vlog2.pop %v701
  %v703 = vmul.f32 %v702, 0.6931472
  %v704 = vmul.f32 -0.5, %v637
  %v705 = vadd.f32 %v704, 1.0
  %v706 = vmul.f32 %v705, %v637
  %v707 = vand.u32 2147483647, %v637
  %vm708 = vcmp.lt.f32.partialorder %v707, 0.0004427343
  %v709 = vsel %vm708, %v706, %v703
  %v710 = vsel %vm606, %v521, %v646
  %v711 = vsel %vm607, %v533, %v655
  %v712 = vsel %vm608, %v545, %v664
  %v713 = vsel %vm609, %v557, %v673
  %v714 = vsel %vm610, %v569, %v682
  %v715 = vsel %vm611, %v581, %v691
  %v716 = vsel %vm612, %v593, %v700
  %v717 = vsel %vm613, %v605, %v709
  %v718 = vrsqrt.pop %v710
  %v719 = vmul.f32 %v718, %v710
  %v720 = vmul.f32 %v719, %v718
  %v721 = vmul.f32 0.5, %v720
  %v722 = vsub.f32 1.5, %v721
  %v723 = vmul.f32 %v718, %v722
  %v724 = vmul.f32 %v710, %v723
  %vm725 = vcmp.eq.f32.partialorder %v710, inf
  %v726 = vsel %vm725, %v710, %v724
  %vm727 = vcmp.eq.f32.partialorder %v710, 0.0
  %v728 = vand.u32 %v710, 2147483648
  %v729 = vsel %vm727, %v728, %v726
  %v730 = vrsqrt.pop %v711
  %v731 = vmul.f32 %v730, %v711
  %v732 = vmul.f32 %v731, %v730
  %v733 = vmul.f32 0.5, %v732
  %v734 = vsub.f32 1.5, %v733
  %v735 = vmul.f32 %v730, %v734
  %v736 = vmul.f32 %v711, %v735
  %vm737 = vcmp.eq.f32.partialorder %v711, inf
  %v738 = vsel %vm737, %v711, %v736
  %vm739 = vcmp.eq.f32.partialorder %v711, 0.0
  %v740 = vand.u32 %v711, 2147483648
  %v741 = vsel %vm739, %v740, %v738
  %v742 = vrsqrt.pop %v712
  %v743 = vmul.f32 %v742, %v712
  %v744 = vmul.f32 %v743, %v742
  %v745 = vmul.f32 0.5, %v744
  %v746 = vsub.f32 1.5, %v745
  %v747 = vmul.f32 %v742, %v746
  %v748 = vmul.f32 %v712, %v747
  %vm749 = vcmp.eq.f32.partialorder %v712, inf
  %v750 = vsel %vm749, %v712, %v748
  %vm751 = vcmp.eq.f32.partialorder %v712, 0.0
  %v752 = vand.u32 %v712, 2147483648
  %v753 = vsel %vm751, %v752, %v750
  %v754 = vrsqrt.pop %v713
  %v755 = vmul.f32 %v754, %v713
  %v756 = vmul.f32 %v755, %v754
  %v757 = vmul.f32 0.5, %v756
  %v758 = vsub.f32 1.5, %v757
  %v759 = vmul.f32 %v754, %v758
  %v760 = vmul.f32 %v713, %v759
  %vm761 = vcmp.eq.f32.partialorder %v713, inf
  %v762 = vsel %vm761, %v713, %v760
  %vm763 = vcmp.eq.f32.partialorder %v713, 0.0
  %v764 = vand.u32 %v713, 2147483648
  %v765 = vsel %vm763, %v764, %v762
  %v766 = vrsqrt.pop %v714
  %v767 = vmul.f32 %v766, %v714
  %v768 = vmul.f32 %v767, %v766
  %v769 = vmul.f32 0.5, %v768
  %v770 = vsub.f32 1.5, %v769
  %v771 = vmul.f32 %v766, %v770
  %v772 = vmul.f32 %v714, %v771
  %vm773 = vcmp.eq.f32.partialorder %v714, inf
  %v774 = vsel %vm773, %v714, %v772
  %vm775 = vcmp.eq.f32.partialorder %v714, 0.0
  %v776 = vand.u32 %v714, 2147483648
  %v777 = vsel %vm775, %v776, %v774
  %v778 = vrsqrt.pop %v715
  %v779 = vmul.f32 %v778, %v715
  %v780 = vmul.f32 %v779, %v778
  %v781 = vmul.f32 0.5, %v780
  %v782 = vsub.f32 1.5, %v781
  %v783 = vmul.f32 %v778, %v782
  %v784 = vmul.f32 %v715, %v783
  %vm785 = vcmp.eq.f32.partialorder %v715, inf
  %v786 = vsel %vm785, %v715, %v784
  %vm787 = vcmp.eq.f32.partialorder %v715, 0.0
  %v788 = vand.u32 %v715, 2147483648
  %v789 = vsel %vm787, %v788, %v786
  %v790 = vrsqrt.pop %v716
  %v791 = vmul.f32 %v790, %v716
  %v792 = vmul.f32 %v791, %v790
  %v793 = vmul.f32 0.5, %v792
  %v794 = vsub.f32 1.5, %v793
  %v795 = vmul.f32 %v790, %v794
  %v796 = vmul.f32 %v716, %v795
  %vm797 = vcmp.eq.f32.partialorder %v716, inf
  %v798 = vsel %vm797, %v716, %v796
  %vm799 = vcmp.eq.f32.partialorder %v716, 0.0
  %v800 = vand.u32 %v716, 2147483648
  %v801 = vsel %vm799, %v800, %v798
  %v802 = vrsqrt.pop %v717
  %v803 = vmul.f32 %v802, %v717
  %v804 = vmul.f32 %v803, %v802
  %v805 = vmul.f32 0.5, %v804
  %v806 = vsub.f32 1.5, %v805
  %v807 = vmul.f32 %v802, %v806
  %v808 = vmul.f32 %v717, %v807
  %vm809 = vcmp.eq.f32.partialorder %v717, inf
  %v810 = vsel %vm809, %v717, %v808
  %vm811 = vcmp.eq.f32.partialorder %v717, 0.0
  %v812 = vand.u32 %v717, 2147483648
  %v813 = vsel %vm811, %v812, %v810
  %v814 = vrsqrt.pop %v729
  %v815 = vmul.f32 %v814, %v729
  %v816 = vmul.f32 %v815, %v814
  %v817 = vmul.f32 0.5, %v816
  %v818 = vsub.f32 1.5, %v817
  %v819 = vmul.f32 %v814, %v818
  %v820 = vmul.f32 %v729, %v819
  %vm821 = vcmp.eq.f32.partialorder %v729, inf
  %v822 = vsel %vm821, %v729, %v820
  %vm823 = vcmp.eq.f32.partialorder %v729, 0.0
  %v824 = vand.u32 %v729, 2147483648
  %v825 = vsel %vm823, %v824, %v822
  %v826 = vrsqrt.pop %v741
  %v827 = vmul.f32 %v826, %v741
  %v828 = vmul.f32 %v827, %v826
  %v829 = vmul.f32 0.5, %v828
  %v830 = vsub.f32 1.5, %v829
  %v831 = vmul.f32 %v826, %v830
  %v832 = vmul.f32 %v741, %v831
  %vm833 = vcmp.eq.f32.partialorder %v741, inf
  %v834 = vsel %vm833, %v741, %v832
  %vm835 = vcmp.eq.f32.partialorder %v741, 0.0
  %v836 = vand.u32 %v741, 2147483648
  %v837 = vsel %vm835, %v836, %v834
  %v838 = vrsqrt.pop %v753
  %v839 = vmul.f32 %v838, %v753
  %v840 = vmul.f32 %v839, %v838
  %v841 = vmul.f32 0.5, %v840
  %v842 = vsub.f32 1.5, %v841
  %v843 = vmul.f32 %v838, %v842
  %v844 = vmul.f32 %v753, %v843
  %vm845 = vcmp.eq.f32.partialorder %v753, inf
  %v846 = vsel %vm845, %v753, %v844
  %vm847 = vcmp.eq.f32.partialorder %v753, 0.0
  %v848 = vand.u32 %v753, 2147483648
  %v849 = vsel %vm847, %v848, %v846
  %v850 = vrsqrt.pop %v765
  %v851 = vmul.f32 %v850, %v765
  %v852 = vmul.f32 %v851, %v850
  %v853 = vmul.f32 0.5, %v852
  %v854 = vsub.f32 1.5, %v853
  %v855 = vmul.f32 %v850, %v854
  %v856 = vmul.f32 %v765, %v855
  %vm857 = vcmp.eq.f32.partialorder %v765, inf
  %v858 = vsel %vm857, %v765, %v856
  %vm859 = vcmp.eq.f32.partialorder %v765, 0.0
  %v860 = vand.u32 %v765, 2147483648
  %v861 = vsel %vm859, %v860, %v858
  %v862 = vrsqrt.pop %v777
  %v863 = vmul.f32 %v862, %v777
  %v864 = vmul.f32 %v863, %v862
  %v865 = vmul.f32 0.5, %v864
  %v866 = vsub.f32 1.5, %v865
  %v867 = vmul.f32 %v862, %v866
  %v868 = vmul.f32 %v777, %v867
  %vm869 = vcmp.eq.f32.partialorder %v777, inf
  %v870 = vsel %vm869, %v777, %v868
  %vm871 = vcmp.eq.f32.partialorder %v777, 0.0
  %v872 = vand.u32 %v777, 2147483648
  %v873 = vsel %vm871, %v872, %v870
  %v874 = vrsqrt.pop %v789
  %v875 = vmul.f32 %v874, %v789
  %v876 = vmul.f32 %v875, %v874
  %v877 = vmul.f32 0.5, %v876
  %v878 = vsub.f32 1.5, %v877
  %v879 = vmul.f32 %v874, %v878
  %v880 = vmul.f32 %v789, %v879
  %vm881 = vcmp.eq.f32.partialorder %v789, inf
  %v882 = vsel %vm881, %v789, %v880
  %vm883 = vcmp.eq.f32.partialorder %v789, 0.0
  %v884 = vand.u32 %v789, 2147483648
  %v885 = vsel %vm883, %v884, %v882
  %v886 = vrsqrt.pop %v801
  %v887 = vmul.f32 %v886, %v801
  %v888 = vmul.f32 %v887, %v886
  %v889 = vmul.f32 0.5, %v888
  %v890 = vsub.f32 1.5, %v889
  %v891 = vmul.f32 %v886, %v890
  %v892 = vmul.f32 %v801, %v891
  %vm893 = vcmp.eq.f32.partialorder %v801, inf
  %v894 = vsel %vm893, %v801, %v892
  %vm895 = vcmp.eq.f32.partialorder %v801, 0.0
  %v896 = vand.u32 %v801, 2147483648
  %v897 = vsel %vm895, %v896, %v894
  %v898 = vrsqrt.pop %v813
  %v899 = vmul.f32 %v898, %v813
  %v900 = vmul.f32 %v899, %v898
  %v901 = vmul.f32 0.5, %v900
  %v902 = vsub.f32 1.5, %v901
  %v903 = vmul.f32 %v898, %v902
  %v904 = vmul.f32 %v813, %v903
  %vm905 = vcmp.eq.f32.partialorder %v813, inf
  %v906 = vsel %vm905, %v813, %v904
  %vm907 = vcmp.eq.f32.partialorder %v813, 0.0
  %v908 = vand.u32 %v813, 2147483648
  %v909 = vsel %vm907, %v908, %v906
  %vm910 = vcmp.gt.f32.partialorder %v825, 20.0
  %vm911 = vcmp.gt.f32.partialorder %v837, 20.0
  %vm912 = vcmp.gt.f32.partialorder %v849, 20.0
  %vm913 = vcmp.gt.f32.partialorder %v861, 20.0
  %vm914 = vcmp.gt.f32.partialorder %v873, 20.0
  %vm915 = vcmp.gt.f32.partialorder %v885, 20.0
  %vm916 = vcmp.gt.f32.partialorder %v897, 20.0
  %vm917 = vcmp.gt.f32.partialorder %v909, 20.0
  %v918 = vmin.f32 %v825, 20.0
  %v919 = vmin.f32 %v837, 20.0
  %v920 = vmin.f32 %v849, 20.0
  %v921 = vmin.f32 %v861, 20.0
  %v922 = vmin.f32 %v873, 20.0
  %v923 = vmin.f32 %v885, 20.0
  %v924 = vmin.f32 %v897, 20.0
  %v925 = vmin.f32 %v909, 20.0
  %v926 = vmul.f32 %v918, 1.442695
  %v927 = vpow.pop %v926
  %v928 = vmul.f32 %v919, 1.442695
  %v929 = vpow.pop %v928
  %v930 = vmul.f32 %v920, 1.442695
  %v931 = vpow.pop %v930
  %v932 = vmul.f32 %v921, 1.442695
  %v933 = vpow.pop %v932
  %v934 = vmul.f32 %v922, 1.442695
  %v935 = vpow.pop %v934
  %v936 = vmul.f32 %v923, 1.442695
  %v937 = vpow.pop %v936
  %v938 = vmul.f32 %v924, 1.442695
  %v939 = vpow.pop %v938
  %v940 = vmul.f32 %v925, 1.442695
  %v941 = vpow.pop %v940
  %v942 = vadd.f32 %v927, 1.0
  %v943 = vlog2.pop %v942
  %v944 = vmul.f32 %v943, 0.6931472
  %v945 = vmul.f32 -0.5, %v927
  %v946 = vadd.f32 %v945, 1.0
  %v947 = vmul.f32 %v946, %v927
  %v948 = vand.u32 2147483647, %v927
  %vm949 = vcmp.lt.f32.partialorder %v948, 0.0004427343
  %v950 = vsel %vm949, %v947, %v944
  %v951 = vadd.f32 %v929, 1.0
  %v952 = vlog2.pop %v951
  %v953 = vmul.f32 %v952, 0.6931472
  %v954 = vmul.f32 -0.5, %v929
  %v955 = vadd.f32 %v954, 1.0
  %v956 = vmul.f32 %v955, %v929
  %v957 = vand.u32 2147483647, %v929
  %vm958 = vcmp.lt.f32.partialorder %v957, 0.0004427343
  %v959 = vsel %vm958, %v956, %v953
  %v960 = vadd.f32 %v931, 1.0
  %v961 = vlog2.pop %v960
  %v962 = vmul.f32 %v961, 0.6931472
  %v963 = vmul.f32 -0.5, %v931
  %v964 = vadd.f32 %v963, 1.0
  %v965 = vmul.f32 %v964, %v931
  %v966 = vand.u32 2147483647, %v931
  %vm967 = vcmp.lt.f32.partialorder %v966, 0.0004427343
  %v968 = vsel %vm967, %v965, %v962
  %v969 = vadd.f32 %v933, 1.0
  %v970 = vlog2.pop %v969
  %v971 = vmul.f32 %v970, 0.6931472
  %v972 = vmul.f32 -0.5, %v933
  %v973 = vadd.f32 %v972, 1.0
  %v974 = vmul.f32 %v973, %v933
  %v975 = vand.u32 2147483647, %v933
  %vm976 = vcmp.lt.f32.partialorder %v975, 0.0004427343
  %v977 = vsel %vm976, %v974, %v971
  %v978 = vadd.f32 %v935, 1.0
  %v979 = vlog2.pop %v978
  %v980 = vmul.f32 %v979, 0.6931472
  %v981 = vmul.f32 -0.5, %v935
  %v982 = vadd.f32 %v981, 1.0
  %v983 = vmul.f32 %v982, %v935
  %v984 = vand.u32 2147483647, %v935
  %vm985 = vcmp.lt.f32.partialorder %v984, 0.0004427343
  %v986 = vsel %vm985, %v983, %v980
  %v987 = vadd.f32 %v937, 1.0
  %v988 = vlog2.pop %v987
  %v989 = vmul.f32 %v988, 0.6931472
  %v990 = vmul.f32 -0.5, %v937
  %v991 = vadd.f32 %v990, 1.0
  %v992 = vmul.f32 %v991, %v937
  %v993 = vand.u32 2147483647, %v937
  %vm994 = vcmp.lt.f32.partialorder %v993, 0.0004427343
  %v995 = vsel %vm994, %v992, %v989
  %v996 = vadd.f32 %v939, 1.0
  %v997 = vlog2.pop %v996
  %v998 = vmul.f32 %v997, 0.6931472
  %v999 = vmul.f32 -0.5, %v939
  %v1000 = vadd.f32 %v999, 1.0
  %v1001 = vmul.f32 %v1000, %v939
  %v1002 = vand.u32 2147483647, %v939
  %vm1003 = vcmp.lt.f32.partialorder %v1002, 0.0004427343
  %v1004 = vsel %vm1003, %v1001, %v998
  %v1005 = vadd.f32 %v941, 1.0
  %v1006 = vlog2.pop %v1005
  %v1007 = vmul.f32 %v1006, 0.6931472
  %v1008 = vmul.f32 -0.5, %v941
  %v1009 = vadd.f32 %v1008, 1.0
  %v1010 = vmul.f32 %v1009, %v941
  %v1011 = vand.u32 2147483647, %v941
  %vm1012 = vcmp.lt.f32.partialorder %v1011, 0.0004427343
  %v1013 = vsel %vm1012, %v1010, %v1007
  %v1014 = vsel %vm910, %v825, %v950
  %v1015 = vsel %vm911, %v837, %v959
  %v1016 = vsel %vm912, %v849, %v968
  %v1017 = vsel %vm913, %v861, %v977
  %v1018 = vsel %vm914, %v873, %v986
  %v1019 = vsel %vm915, %v885, %v995
  %v1020 = vsel %vm916, %v897, %v1004
  %v1021 = vsel %vm917, %v909, %v1013
  %v1022 = vrsqrt.pop %v1014
  %v1023 = vmul.f32 %v1022, %v1014
  %v1024 = vmul.f32 %v1023, %v1022
  %v1025 = vmul.f32 0.5, %v1024
  %v1026 = vsub.f32 1.5, %v1025
  %v1027 = vmul.f32 %v1022, %v1026
  %v1028 = vmul.f32 %v1014, %v1027
  %vm1029 = vcmp.eq.f32.partialorder %v1014, inf
  %v1030 = vsel %vm1029, %v1014, %v1028
  %vm1031 = vcmp.eq.f32.partialorder %v1014, 0.0
  %v1032 = vand.u32 %v1014, 2147483648
  %v1033 = vsel %vm1031, %v1032, %v1030
  %v1034 = vrsqrt.pop %v1015
  %v1035 = vmul.f32 %v1034, %v1015
  %v1036 = vmul.f32 %v1035, %v1034
  %v1037 = vmul.f32 0.5, %v1036
  %v1038 = vsub.f32 1.5, %v1037
  %v1039 = vmul.f32 %v1034, %v1038
  %v1040 = vmul.f32 %v1015, %v1039
  %vm1041 = vcmp.eq.f32.partialorder %v1015, inf
  %v1042 = vsel %vm1041, %v1015, %v1040
  %vm1043 = vcmp.eq.f32.partialorder %v1015, 0.0
  %v1044 = vand.u32 %v1015, 2147483648
  %v1045 = vsel %vm1043, %v1044, %v1042
  %v1046 = vrsqrt.pop %v1016
  %v1047 = vmul.f32 %v1046, %v1016
  %v1048 = vmul.f32 %v1047, %v1046
  %v1049 = vmul.f32 0.5, %v1048
  %v1050 = vsub.f32 1.5, %v1049
  %v1051 = vmul.f32 %v1046, %v1050
  %v1052 = vmul.f32 %v1016, %v1051
  %vm1053 = vcmp.eq.f32.partialorder %v1016, inf
  %v1054 = vsel %vm1053, %v1016, %v1052
  %vm1055 = vcmp.eq.f32.partialorder %v1016, 0.0
  %v1056 = vand.u32 %v1016, 2147483648
  %v1057 = vsel %vm1055, %v1056, %v1054
  %v1058 = vrsqrt.pop %v1017
  %v1059 = vmul.f32 %v1058, %v1017
  %v1060 = vmul.f32 %v1059, %v1058
  %v1061 = vmul.f32 0.5, %v1060
  %v1062 = vsub.f32 1.5, %v1061
  %v1063 = vmul.f32 %v1058, %v1062
  %v1064 = vmul.f32 %v1017, %v1063
  %vm1065 = vcmp.eq.f32.partialorder %v1017, inf
  %v1066 = vsel %vm1065, %v1017, %v1064
  %vm1067 = vcmp.eq.f32.partialorder %v1017, 0.0
  %v1068 = vand.u32 %v1017, 2147483648
  %v1069 = vsel %vm1067, %v1068, %v1066
  %v1070 = vrsqrt.pop %v1018
  %v1071 = vmul.f32 %v1070, %v1018
  %v1072 = vmul.f32 %v1071, %v1070
  %v1073 = vmul.f32 0.5, %v1072
  %v1074 = vsub.f32 1.5, %v1073
  %v1075 = vmul.f32 %v1070, %v1074
  %v1076 = vmul.f32 %v1018, %v1075
  %vm1077 = vcmp.eq.f32.partialorder %v1018, inf
  %v1078 = vsel %vm1077, %v1018, %v1076
  %vm1079 = vcmp.eq.f32.partialorder %v1018, 0.0
  %v1080 = vand.u32 %v1018, 2147483648
  %v1081 = vsel %vm1079, %v1080, %v1078
  %v1082 = vrsqrt.pop %v1019
  %v1083 = vmul.f32 %v1082, %v1019
  %v1084 = vmul.f32 %v1083, %v1082
  %v1085 = vmul.f32 0.5, %v1084
  %v1086 = vsub.f32 1.5, %v1085
  %v1087 = vmul.f32 %v1082, %v1086
  %v1088 = vmul.f32 %v1019, %v1087
  %vm1089 = vcmp.eq.f32.partialorder %v1019, inf
  %v1090 = vsel %vm1089, %v1019, %v1088
  %vm1091 = vcmp.eq.f32.partialorder %v1019, 0.0
  %v1092 = vand.u32 %v1019, 2147483648
  %v1093 = vsel %vm1091, %v1092, %v1090
  %v1094 = vrsqrt.pop %v1020
  %v1095 = vmul.f32 %v1094, %v1020
  %v1096 = vmul.f32 %v1095, %v1094
  %v1097 = vmul.f32 0.5, %v1096
  %v1098 = vsub.f32 1.5, %v1097
  %v1099 = vmul.f32 %v1094, %v1098
  %v1100 = vmul.f32 %v1020, %v1099
  %vm1101 = vcmp.eq.f32.partialorder %v1020, inf
  %v1102 = vsel %vm1101, %v1020, %v1100
  %vm1103 = vcmp.eq.f32.partialorder %v1020, 0.0
  %v1104 = vand.u32 %v1020, 2147483648
  %v1105 = vsel %vm1103, %v1104, %v1102
  %v1106 = vrsqrt.pop %v1021
  %v1107 = vmul.f32 %v1106, %v1021
  %v1108 = vmul.f32 %v1107, %v1106
  %v1109 = vmul.f32 0.5, %v1108
  %v1110 = vsub.f32 1.5, %v1109
  %v1111 = vmul.f32 %v1106, %v1110
  %v1112 = vmul.f32 %v1021, %v1111
  %vm1113 = vcmp.eq.f32.partialorder %v1021, inf
  %v1114 = vsel %vm1113, %v1021, %v1112
  %vm1115 = vcmp.eq.f32.partialorder %v1021, 0.0
  %v1116 = vand.u32 %v1021, 2147483648
  %v1117 = vsel %vm1115, %v1116, %v1114
  %v1118 = vrsqrt.pop %v1033
  %v1119 = vmul.f32 %v1118, %v1033
  %v1120 = vmul.f32 %v1119, %v1118
  %v1121 = vmul.f32 0.5, %v1120
  %v1122 = vsub.f32 1.5, %v1121
  %v1123 = vmul.f32 %v1118, %v1122
  %v1124 = vmul.f32 %v1033, %v1123
  %vm1125 = vcmp.eq.f32.partialorder %v1033, inf
  %v1126 = vsel %vm1125, %v1033, %v1124
  %vm1127 = vcmp.eq.f32.partialorder %v1033, 0.0
  %v1128 = vand.u32 %v1033, 2147483648
  %v1129 = vsel %vm1127, %v1128, %v1126
  %v1130 = vrsqrt.pop %v1045
  %v1131 = vmul.f32 %v1130, %v1045
  %v1132 = vmul.f32 %v1131, %v1130
  %v1133 = vmul.f32 0.5, %v1132
  %v1134 = vsub.f32 1.5, %v1133
  %v1135 = vmul.f32 %v1130, %v1134
  %v1136 = vmul.f32 %v1045, %v1135
  %vm1137 = vcmp.eq.f32.partialorder %v1045, inf
  %v1138 = vsel %vm1137, %v1045, %v1136
  %vm1139 = vcmp.eq.f32.partialorder %v1045, 0.0
  %v1140 = vand.u32 %v1045, 2147483648
  %v1141 = vsel %vm1139, %v1140, %v1138
  %v1142 = vrsqrt.pop %v1057
  %v1143 = vmul.f32 %v1142, %v1057
  %v1144 = vmul.f32 %v1143, %v1142
  %v1145 = vmul.f32 0.5, %v1144
  %v1146 = vsub.f32 1.5, %v1145
  %v1147 = vmul.f32 %v1142, %v1146
  %v1148 = vmul.f32 %v1057, %v1147
  %vm1149 = vcmp.eq.f32.partialorder %v1057, inf
  %v1150 = vsel %vm1149, %v1057, %v1148
  %vm1151 = vcmp.eq.f32.partialorder %v1057, 0.0
  %v1152 = vand.u32 %v1057, 2147483648
  %v1153 = vsel %vm1151, %v1152, %v1150
  %v1154 = vrsqrt.pop %v1069
  %v1155 = vmul.f32 %v1154, %v1069
  %v1156 = vmul.f32 %v1155, %v1154
  %v1157 = vmul.f32 0.5, %v1156
  %v1158 = vsub.f32 1.5, %v1157
  %v1159 = vmul.f32 %v1154, %v1158
  %v1160 = vmul.f32 %v1069, %v1159
  %vm1161 = vcmp.eq.f32.partialorder %v1069, inf
  %v1162 = vsel %vm1161, %v1069, %v1160
  %vm1163 = vcmp.eq.f32.partialorder %v1069, 0.0
  %v1164 = vand.u32 %v1069, 2147483648
  %v1165 = vsel %vm1163, %v1164, %v1162
  %v1166 = vrsqrt.pop %v1081
  %v1167 = vmul.f32 %v1166, %v1081
  %v1168 = vmul.f32 %v1167, %v1166
  %v1169 = vmul.f32 0.5, %v1168
  %v1170 = vsub.f32 1.5, %v1169
  %v1171 = vmul.f32 %v1166, %v1170
  %v1172 = vmul.f32 %v1081, %v1171
  %vm1173 = vcmp.eq.f32.partialorder %v1081, inf
  %v1174 = vsel %vm1173, %v1081, %v1172
  %vm1175 = vcmp.eq.f32.partialorder %v1081, 0.0
  %v1176 = vand.u32 %v1081, 2147483648
  %v1177 = vsel %vm1175, %v1176, %v1174
  %v1178 = vrsqrt.pop %v1093
  %v1179 = vmul.f32 %v1178, %v1093
  %v1180 = vmul.f32 %v1179, %v1178
  %v1181 = vmul.f32 0.5, %v1180
  %v1182 = vsub.f32 1.5, %v1181
  %v1183 = vmul.f32 %v1178, %v1182
  %v1184 = vmul.f32 %v1093, %v1183
  %vm1185 = vcmp.eq.f32.partialorder %v1093, inf
  %v1186 = vsel %vm1185, %v1093, %v1184
  %vm1187 = vcmp.eq.f32.partialorder %v1093, 0.0
  %v1188 = vand.u32 %v1093, 2147483648
  %v1189 = vsel %vm1187, %v1188, %v1186
  %v1190 = vrsqrt.pop %v1105
  %v1191 = vmul.f32 %v1190, %v1105
  %v1192 = vmul.f32 %v1191, %v1190
  %v1193 = vmul.f32 0.5, %v1192
  %v1194 = vsub.f32 1.5, %v1193
  %v1195 = vmul.f32 %v1190, %v1194
  %v1196 = vmul.f32 %v1105, %v1195
  %vm1197 = vcmp.eq.f32.partialorder %v1105, inf
  %v1198 = vsel %vm1197, %v1105, %v1196
  %vm1199 = vcmp.eq.f32.partialorder %v1105, 0.0
  %v1200 = vand.u32 %v1105, 2147483648
  %v1201 = vsel %vm1199, %v1200, %v1198
  %v1202 = vrsqrt.pop %v1117
  %v1203 = vmul.f32 %v1202, %v1117
  %v1204 = vmul.f32 %v1203, %v1202
  %v1205 = vmul.f32 0.5, %v1204
  %v1206 = vsub.f32 1.5, %v1205
  %v1207 = vmul.f32 %v1202, %v1206
  %v1208 = vmul.f32 %v1117, %v1207
  %vm1209 = vcmp.eq.f32.partialorder %v1117, inf
  %v1210 = vsel %vm1209, %v1117, %v1208
  %vm1211 = vcmp.eq.f32.partialorder %v1117, 0.0
  %v1212 = vand.u32 %v1117, 2147483648
  %v1213 = vsel %vm1211, %v1212, %v1210
  %v1214 = vld [vmem:[%s5] sm:$0xff]
  %v1215 = vld [vmem:[%s5 + $0x8] sm:$0xff]
  %v1216 = vld [vmem:[%s6] sm:$0xff]
  %v1217 = vld [vmem:[%s6 + $0x8] sm:$0xff]
  %1219 = vset.pattern.permute.xlu0 0
  %1220 = vperm.xlu0 %1219, %v1216
  %v1221 = vpop.permute.xlu0 %1220
  %1224 = vset.pattern.permute.xlu0 0
  %1225 = vperm.xlu0 %1224, %v1217
  %v1226 = vpop.permute.xlu0 %1225
  %vm1228 = vcmask 523264
  %v1230 = vsel %vm1228, %v1214, 0
  %v1233 = vsel %vm1228, %v1215, 0
  %1235 = vmatpush.msra.mxu0 0.0
  %1236 = vmatpush.msra.mxu0 0.0
  %1237 = vmatpush.msra.mxu0 0.0
  %1238 = vmatpush.msra.mxu0 0.0
  %1239 = vmatpush.msra.mxu0 0.0
  %1240 = vmatpush.msra.mxu0 0.0
  %1241 = vmatpush.msra.mxu0 0.0
  %1242 = vmatpush.msra.mxu0 0.0
  %1243 = vmatpush.msra.mxu0 %v1213
  %1244 = vmatpush.msra.mxu0 %v1201
  %1245 = vmatpush.msra.mxu0 %v1189
  %1246 = vmatpush.msra.mxu0 %v1177
  %1247 = vmatpush.msra.mxu0 %v1165
  %1248 = vmatpush.msra.mxu0 %v1153
  %1249 = vmatpush.msra.mxu0 %v1141
  %1250 = vmatpush.msra.mxu0 %v1129
  %1251 = vmatmul.f32.gmra.mxu0 %v1230
  %v1252 = vpop.f32.mrf.mxu0
  %v1253 = vadd.f32 %v1221, %v1252
  %1254 = vmatmul.f32.gmra.mxu0 %v1233
  %v1255 = vpop.f32.mrf.mxu0
  %v1256 = vadd.f32 %v1226, %v1255
  %1257 = vdwg.mxu0
  %1258 = vst [vmem:[%s7] sm:$0xff] %v1253
  %vm1259 = vcmp.gt.f32.partialorder %v1256, 20.0
  %v1260 = vmin.f32 %v1256, 20.0
  %v1261 = vmul.f32 %v1260, 1.442695
  %v1262 = vpow.pop %v1261
  %v1263 = vadd.f32 %v1262, 1.0
  %v1264 = vlog2.pop %v1263
  %v1265 = vmul.f32 %v1264, 0.6931472
  %v1266 = vmul.f32 -0.5, %v1262
  %v1267 = vadd.f32 %v1266, 1.0
  %v1268 = vmul.f32 %v1267, %v1262
  %v1269 = vand.u32 2147483647, %v1262
  %vm1270 = vcmp.lt.f32.partialorder %v1269, 0.0004427343
  %v1271 = vsel %vm1270, %v1268, %v1265
  %v1272 = vsel %vm1259, %v1256, %v1271
  %v1273 = vrsqrt.pop %v1272
  %v1274 = vmul.f32 %v1273, %v1272
  %v1275 = vmul.f32 %v1274, %v1273
  %v1276 = vmul.f32 0.5, %v1275
  %v1277 = vsub.f32 1.5, %v1276
  %v1278 = vmul.f32 %v1273, %v1277
  %v1279 = vmul.f32 %v1272, %v1278
  %vm1280 = vcmp.eq.f32.partialorder %v1272, inf
  %v1281 = vsel %vm1280, %v1272, %v1279
  %vm1282 = vcmp.eq.f32.partialorder %v1272, 0.0
  %v1283 = vand.u32 %v1272, 2147483648
  %v1284 = vsel %vm1282, %v1283, %v1281
  %v1285 = vrsqrt.pop %v1284
  %v1286 = vmul.f32 %v1285, %v1284
  %v1287 = vmul.f32 %v1286, %v1285
  %v1288 = vmul.f32 0.5, %v1287
  %v1289 = vsub.f32 1.5, %v1288
  %v1290 = vmul.f32 %v1285, %v1289
  %v1291 = vmul.f32 %v1284, %v1290
  %vm1292 = vcmp.eq.f32.partialorder %v1284, inf
  %v1293 = vsel %vm1292, %v1284, %v1291
  %vm1294 = vcmp.eq.f32.partialorder %v1284, 0.0
  %v1295 = vand.u32 %v1284, 2147483648
  %v1296 = vsel %vm1294, %v1295, %v1293
  %1297 = vst [vmem:[%s7 + $0x8] sm:$0xff] %v1296
  // Predicated region
  $region30: #{encoder_forward.1} parent=0 // pred_check
    _
  $region31: #{encoder_forward.1} parent=0 // pred_check_branch
    %1299 = sbr.rel (0) target = $region33
  $region32: #{encoder_forward.1} parent=0 // pred_region
    _
  $region33: #{encoder_forward.1} parent=0 // pred_fallthru
    _
  // Predicated region
  $region34: #{encoder_forward.1} parent=0 // pred_check
    _
  $region35: #{encoder_forward.1} parent=0 // pred_check_branch
    %1301 = sbr.rel (0) target = $region37
  $region36: #{encoder_forward.1} parent=0 // pred_region
    _
  $region37: #{encoder_forward.1} parent=0 // pred_fallthru
    _

</llo_original>
